<compile_context>
chip_gen: v5e
topology: v5e:2x2
jax: 0.10.0
libtpu: 0.0.40
codegen_flags: <defaults>
</compile_context>

<pallas_src>
import functools

import jax
import jax.numpy as jnp
from jax import lax
from jax.experimental import pallas as pl
from jax.experimental.pallas import tpu as pltpu

EPS = 1e-5                       # nn.GroupNorm default eps
GROUPS = 32                      # nn.GroupNorm(32, C)
VMEM_LIMIT = 32 * 1024 * 1024    # safe on v5e (128 MiB), v6e (128 MiB), v7x (64 MiB)


# ----------------------------------------------------------------------------
# Tile-size helpers
# ----------------------------------------------------------------------------
def _channel_tile(c, target=256):
    """Full dim if small; otherwise the largest multiple of 128 <= target that
    divides c (lane-aligned, MXU-friendly).  Use target=128 on v5e."""
    if c <= target:
        return c
    t = (target // 128) * 128
    while t >= 128:
        if c % t == 0:
            return t
        t -= 128
    return c


def _spatial_tile(hw, target=2048):
    """Spatial (sublane) tile for the stats reduction kernel."""
    if hw <= target:
        return hw
    t = (target // 8) * 8
    while t >= 8:
        if hw % t == 0:
            return t
        t -= 8
    return hw


# ----------------------------------------------------------------------------
# Kernel 1: GroupNorm statistics (channel sums, accumulated over spatial tiles)
# ----------------------------------------------------------------------------
def gn_stats_kernel(x_ref, sum_ref, sq_ref):
    @pl.when(pl.program_id(1) == 0)
    def _init():
        sum_ref[...] = jnp.zeros_like(sum_ref)
        sq_ref[...] = jnp.zeros_like(sq_ref)

    x = x_ref[0].astype(jnp.float32)                     # (THW, C)
    sum_ref[0] += jnp.sum(x, axis=0, keepdims=True)
    sq_ref[0] += jnp.sum(x * x, axis=0, keepdims=True)


def group_norm_stats(x_flat):
    N, HW, C = x_flat.shape
    thw = _spatial_tile(HW)
    return pl.pallas_call(
        gn_stats_kernel,
        out_shape=(jax.ShapeDtypeStruct((N, 1, C), jnp.float32),
                   jax.ShapeDtypeStruct((N, 1, C), jnp.float32)),
        grid=(N, HW // thw),
        in_specs=[pl.BlockSpec((1, thw, C), lambda n, s: (n, s, 0))],
        out_specs=(pl.BlockSpec((1, 1, C), lambda n, s: (n, 0, 0)),
                   pl.BlockSpec((1, 1, C), lambda n, s: (n, 0, 0))),
        compiler_params=pltpu.CompilerParams(
            dimension_semantics=("parallel", "arbitrary"),
            vmem_limit_bytes=VMEM_LIMIT),
    )(x_flat)


def _gn_scale_shift(ch_sum, ch_sq, gamma, beta, hw, groups=GROUPS):
    """(N,1,C) channel sums -> per-channel scale/shift s.t. GN(x) = x*scale+shift.
    Tiny (N, C)-sized math -> plain XLA (no kernel launch / no (C,C) gmat)."""
    N = ch_sum.shape[0]
    C = ch_sum.shape[-1]
    cg = C // groups
    cnt = float(hw * cg)
    g_sum = ch_sum.reshape(N, groups, cg).sum(axis=-1)
    g_sq = ch_sq.reshape(N, groups, cg).sum(axis=-1)
    mean = g_sum / cnt
    # Single-pass E[x^2]-mean^2 with f32 accumulation (stats kernel is always
    # f32 even when the conv matmuls run bf16 operands).
    var = g_sq / cnt - mean * mean
    rstd = lax.rsqrt(var + EPS)
    scale = jnp.repeat(rstd, cg, axis=1) * gamma[None, :]
    shift = beta[None, :] - jnp.repeat(mean, cg, axis=1) * scale
    return scale.reshape(N, 1, C), shift.reshape(N, 1, C)


# ----------------------------------------------------------------------------
# Kernel 2: fused GroupNorm + SiLU + 3x3 conv (+ temb / shortcut epilogue)
# ----------------------------------------------------------------------------
def fused_gn_silu_conv3x3_kernel(*refs, H, W, mode, compute_dtype):
    """Grid (N, Cout tiles, Cin tiles); Cin is the reduction axis (last).
    Partial products accumulate in a float32 VMEM scratch (init at k==0,
    epilogue + writeback at the last k)."""
    if mode == "temb":
        (x_ref, scale_ref, shift_ref, w_ref, b_ref, temb_ref,
         o_ref, acc_ref) = refs
    elif mode == "shortcut_mm":
        (x_ref, scale_ref, shift_ref, w_ref, b_ref, xres_ref, scw_ref,
         o_ref, acc_ref) = refs
    else:  # "residual": identity shortcut (in_channels == out_channels)
        (x_ref, scale_ref, shift_ref, w_ref, b_ref, xres_ref,
         o_ref, acc_ref) = refs

    k = pl.program_id(2)

    @pl.when(k == 0)
    def _init():
        acc_ref[...] = jnp.zeros_like(acc_ref)

    HW = H * W
    # GroupNorm (precomputed per-sample/channel scale & shift) + SiLU, f32.
    x = x_ref[0].astype(jnp.float32)                     # (HW, TCi)
    xn = x * scale_ref[0] + shift_ref[0]
    h = xn * jax.nn.sigmoid(xn)                          # SiLU

    # 3x3 conv: 9 taps, each a masked sublane roll of the flattened (HW, TCi)
    # activation (zero padding == zeroing the wrapped / out-of-bounds rows).
    pos = lax.broadcasted_iota(jnp.int32, (HW, 1), 0)
    row = pos // W
    col = pos % W
    for dy in range(3):
        for dx in range(3):
            ty, tx = dy - 1, dx - 1
            if ty == 0 and tx == 0:
                patch = h.astype(compute_dtype)
            else:
                shifted = pltpu.roll(h, shift=(-(ty * W + tx)) % HW, axis=0)
                valid = ((row + ty >= 0) & (row + ty < H) &
                         (col + tx >= 0) & (col + tx < W))
                patch = jnp.where(valid, shifted, 0.0).astype(compute_dtype)
            acc_ref[...] += jnp.dot(
                patch, w_ref[dy * 3 + dx].astype(compute_dtype),
                preferred_element_type=jnp.float32)

    @pl.when(k == pl.num_programs(2) - 1)
    def _finalize():
        out = acc_ref[...] + b_ref[...].astype(jnp.float32)
        if mode == "temb":
            out = out + temb_ref[0].astype(jnp.float32)          # (1, TCo) bcast
        elif mode == "shortcut_mm":
            out = out + jnp.dot(xres_ref[0].astype(compute_dtype),
                                scw_ref[...].astype(compute_dtype),
                                preferred_element_type=jnp.float32)
        else:
            out = out + xres_ref[0].astype(jnp.float32)
        o_ref[0] = out.astype(o_ref.dtype)


def fused_gn_silu_conv3x3(x_flat, scale, shift, w9, bias, H, W, *,
                          temb=None, xres=None, sc_w=None,
                          compute_dtype=jnp.bfloat16,
                          tile_co=256, tile_ci=256):
    # TODO(synk): for very large H*W at high channel counts (e.g. 64x64x512 on
    # v7x's 64 MiB VMEM) add a spatial-stripe grid axis with halo rows fetched
    # via manual make_async_copy; whole-image spatial blocks are kept here
    # because the masked-roll taps need no halo and the test shapes are tiny.
    N, HW, Cin = x_flat.shape
    Cout = w9.shape[-1]
    tco = _channel_tile(Cout, tile_co)
    tci = _channel_tile(Cin, tile_ci)
    grid = (N, Cout // tco, Cin // tci)

    if temb is not None:
        mode = "temb"
    elif sc_w is not None:
        mode = "shortcut_mm"
    else:
        mode = "residual"

    in_specs = [
        pl.BlockSpec((1, HW, tci), lambda n, j, k: (n, 0, k)),    # activation
        pl.BlockSpec((1, 1, tci), lambda n, j, k: (n, 0, k)),     # GN scale
        pl.BlockSpec((1, 1, tci), lambda n, j, k: (n, 0, k)),     # GN shift
        pl.BlockSpec((9, tci, tco), lambda n, j, k: (0, k, j)),   # conv weights
        pl.BlockSpec((1, tco), lambda n, j, k: (0, j)),           # bias
    ]
    args = [x_flat, scale, shift,
            w9.astype(compute_dtype), bias.reshape(1, Cout).astype(jnp.float32)]

    if mode == "temb":
        in_specs.append(pl.BlockSpec((1, 1, tco), lambda n, j, k: (n, 0, j)))
        args.append(temb.reshape(N, 1, Cout).astype(jnp.float32))
    elif mode == "shortcut_mm":
        Cres = xres.shape[-1]
        in_specs += [pl.BlockSpec((1, HW, Cres), lambda n, j, k: (n, 0, 0)),
                     pl.BlockSpec((Cres, tco), lambda n, j, k: (0, j))]
        args += [xres, sc_w.astype(compute_dtype)]
    else:
        in_specs.append(pl.BlockSpec((1, HW, tco), lambda n, j, k: (n, 0, j)))
        args.append(xres)

    kernel = functools.partial(fused_gn_silu_conv3x3_kernel,
                               H=H, W=W, mode=mode, compute_dtype=compute_dtype)
    return pl.pallas_call(
        kernel,
        out_shape=jax.ShapeDtypeStruct((N, HW, Cout), x_flat.dtype),
        grid=grid,
        in_specs=in_specs,
        out_specs=pl.BlockSpec((1, HW, tco), lambda n, j, k: (n, 0, j)),
        scratch_shapes=[pltpu.VMEM((HW, tco), jnp.float32)],
        compiler_params=pltpu.CompilerParams(
            dimension_semantics=("parallel", "parallel", "arbitrary"),
            vmem_limit_bytes=VMEM_LIMIT),
    )(*args)


# ----------------------------------------------------------------------------
# ResnetBlock forward (PyTorch-equivalent semantics, eval / dropout=0.0)
# ----------------------------------------------------------------------------
def resnet_block(x_nchw, temb, p, *, compute_dtype=jnp.bfloat16):
    N, Cin, H, W = x_nchw.shape
    Cout = p["conv1_w"].shape[-1]
    HW = H * W

    x = jnp.transpose(x_nchw, (0, 2, 3, 1)).reshape(N, HW, Cin)   # NCHW -> (N,HW,C)

    # GroupNorm1 statistics (Pallas reduction) -> per-channel scale/shift.
    s1, q1 = group_norm_stats(x)
    sc1, sh1 = _gn_scale_shift(s1, q1, p["gn1_gamma"], p["gn1_beta"], HW)

    # temb_proj(SiLU(temb)) in plain XLA; fused into conv1's epilogue add.
    t = jax.nn.silu(temb.astype(jnp.float32)) @ p["temb_w"] + p["temb_b"]

    # conv1 = GN1 + SiLU + 3x3 conv + bias + temb broadcast, all fused.
    w1 = p["conv1_w"].reshape(9, Cin, Cout)
    h = fused_gn_silu_conv3x3(x, sc1, sh1, w1, p["conv1_b"], H, W,
                              temb=t, compute_dtype=compute_dtype)

    # GroupNorm2 statistics.  dropout(p=0.0) / eval mode is the identity.
    s2, q2 = group_norm_stats(h)
    sc2, sh2 = _gn_scale_shift(s2, q2, p["gn2_gamma"], p["gn2_beta"], HW)

    # conv2 = GN2 + SiLU + 3x3 conv + (bias + shortcut bias) + shortcut, fused.
    w2 = p["conv2_w"].reshape(9, Cout, Cout)
    if Cin != Cout:
        out = fused_gn_silu_conv3x3(h, sc2, sh2, w2, p["conv2_b"] + p["sc_b"],
                                    H, W, xres=x, sc_w=p["sc_w"],
                                    compute_dtype=compute_dtype)
    else:   # identity shortcut
        out = fused_gn_silu_conv3x3(h, sc2, sh2, w2, p["conv2_b"], H, W,
                                    xres=x, compute_dtype=compute_dtype)

    return jnp.transpose(out.reshape(N, H, W, Cout), (0, 3, 1, 2))   # -> NCHW


# ----------------------------------------------------------------------------
# Pure-JAX reference (for verification)
# ----------------------------------------------------------------------------
def reference(x_nchw, temb, p, groups=GROUPS):
    def gn(x, gamma, beta):
        N, C, H, W = x.shape
        cg = C // groups
        xr = x.reshape(N, groups, cg * H * W)
        mean = xr.mean(axis=2, keepdims=True)
        var = ((xr - mean) ** 2).mean(axis=2, keepdims=True)
        xn = ((xr - mean) / jnp.sqrt(var + EPS)).reshape(N, C, H, W)
        return xn * gamma.reshape(1, C, 1, 1) + beta.reshape(1, C, 1, 1)

    def conv(x, w_hwio, b):
        w_oihw = jnp.transpose(w_hwio, (3, 2, 0, 1))
        y = lax.conv_general_dilated(x, w_oihw, (1, 1), "SAME",
                                     dimension_numbers=("NCHW", "OIHW", "NCHW"))
        return y + b.reshape(1, -1, 1, 1)

    h = jax.nn.silu(gn(x_nchw, p["gn1_gamma"], p["gn1_beta"]))
    h = conv(h, p["conv1_w"], p["conv1_b"])
    t = jax.nn.silu(temb) @ p["temb_w"] + p["temb_b"]
    h = h + t[:, :, None, None]
    h = jax.nn.silu(gn(h, p["gn2_gamma"], p["gn2_beta"]))
    h = conv(h, p["conv2_w"], p["conv2_b"])
    sc = jnp.einsum("nchw,cd->ndhw", x_nchw, p["sc_w"]) + p["sc_b"].reshape(1, -1, 1, 1)
    return h + sc


# ----------------------------------------------------------------------------
if __name__ == "__main__":
    N, Cin, Cout, Temb, H, W = 2, 64, 128, 128, 8, 8   # GroupNorm(32): C % 32 == 0

    key = jax.random.PRNGKey(0)
    ks = jax.random.split(key, 12)
    x_nchw = jax.random.normal(ks[0], (N, Cin, H, W), jnp.float32)
    temb = jax.random.normal(ks[1], (N, Temb), jnp.float32)

    params = dict(
        gn1_gamma=1.0 + 0.1 * jax.random.normal(ks[2], (Cin,), jnp.float32),
        gn1_beta=0.1 * jax.random.normal(ks[3], (Cin,), jnp.float32),
        conv1_w=0.05 * jax.random.normal(ks[4], (3, 3, Cin, Cout), jnp.float32),  # HWIO
        conv1_b=0.05 * jax.random.normal(ks[5], (Cout,), jnp.float32),
        temb_w=0.05 * jax.random.normal(ks[6], (Temb, Cout), jnp.float32),
        temb_b=0.05 * jax.random.normal(ks[7], (Cout,), jnp.float32),
        gn2_gamma=1.0 + 0.1 * jax.random.normal(ks[8], (Cout,), jnp.float32),
        gn2_beta=0.1 * jax.random.normal(ks[9], (Cout,), jnp.float32),
        conv2_w=0.05 * jax.random.normal(ks[10], (3, 3, Cout, Cout), jnp.float32),
        conv2_b=jnp.zeros((Cout,), jnp.float32),
        sc_w=0.05 * jax.random.normal(ks[11], (Cin, Cout), jnp.float32),
        sc_b=jnp.zeros((Cout,), jnp.float32),
    )

    ref = jax.block_until_ready(reference(x_nchw, temb, params))

    # fp32 compute path: tight numerical check against the pure-JAX reference.
    out_f32 = jax.block_until_ready(
        resnet_block(x_nchw, temb, params, compute_dtype=jnp.float32))
    assert out_f32.shape == (N, Cout, H, W), out_f32.shape
    assert jnp.allclose(out_f32, ref, atol=1e-3, rtol=1e-3), \
        f"f32 max abs err {jnp.max(jnp.abs(out_f32 - ref))}"

    # bf16-operand MXU path (default / fast): looser tolerance, f32 accumulation.
    out_bf16 = jax.block_until_ready(
        resnet_block(x_nchw, temb, params, compute_dtype=jnp.bfloat16))
    assert jnp.allclose(out_bf16, ref, atol=3e-2, rtol=3e-2), \
        f"bf16 max abs err {jnp.max(jnp.abs(out_bf16 - ref))}"

    print("KERNEL_OK")
</pallas_src>

<mosaic_0001>
module attributes {stable_mosaic.version = 11 : i64} {
  func.func @gn_stats_kernel(%arg0: i32, %arg1: i32, %arg2: memref<1x64x64xf32, #tpu.memory_space<vmem>>, %arg3: memref<1x1x64xf32, #tpu.memory_space<vmem>>, %arg4: memref<1x1x64xf32, #tpu.memory_space<vmem>>) attributes {dimension_semantics = [#tpu.dimension_semantics<parallel>, #tpu.dimension_semantics<arbitrary>], iteration_bounds = array<i64: 2, 1>, scalar_prefetch = 0 : i64, scratch_operands = 0 : i64, tpu.core_type = #tpu.core_type<tc>, window_params = [{transform_indices = @transform_0, window_bounds = array<i64: 1, 64, 64>}, {transform_indices = @transform_1, window_bounds = array<i64: 1, 1, 64>}, {transform_indices = @transform_2, window_bounds = array<i64: 1, 1, 64>}]} {
    %c0_i32 = arith.constant 0 : i32
    %0 = arith.cmpi eq, %arg1, %c0_i32 : i32
    %1 = arith.extui %0 : i1 to i32
    %c0_i32_0 = arith.constant 0 : i32
    %2 = arith.cmpi ne, %1, %c0_i32_0 : i32
    scf.if %2 {
      %cst_16 = arith.constant 0.000000e+00 : f32
      %22 = vector.broadcast %cst_16 : f32 to vector<1x1x64xf32>
      %c0_17 = arith.constant 0 : index
      %c0_18 = arith.constant 0 : index
      %c0_19 = arith.constant 0 : index
      %23 = vector.load %arg3[%c0_17, %c0_18, %c0_19] : memref<1x1x64xf32, #tpu.memory_space<vmem>>, vector<1x1x64xf32>
      tpu.vector_store %arg3[%c0_17, %c0_18, %c0_19], %22 {strides = array<i32>} : memref<1x1x64xf32, #tpu.memory_space<vmem>>, vector<1x1x64xf32>,
      %cst_20 = arith.constant 0.000000e+00 : f32
      %24 = vector.broadcast %cst_20 : f32 to vector<1x1x64xf32>
      %c0_21 = arith.constant 0 : index
      %c0_22 = arith.constant 0 : index
      %c0_23 = arith.constant 0 : index
      %25 = vector.load %arg4[%c0_21, %c0_22, %c0_23] : memref<1x1x64xf32, #tpu.memory_space<vmem>>, vector<1x1x64xf32>
      tpu.vector_store %arg4[%c0_21, %c0_22, %c0_23], %24 {strides = array<i32>} : memref<1x1x64xf32, #tpu.memory_space<vmem>>, vector<1x1x64xf32>,
    } else {
    }
    %c0 = arith.constant 0 : index
    %c0_1 = arith.constant 0 : index
    %c0_2 = arith.constant 0 : index
    %3 = vector.load %arg2[%c0, %c0_1, %c0_2] : memref<1x64x64xf32, #tpu.memory_space<vmem>>, vector<1x64x64xf32>
    %4 = vector.shape_cast %3 : vector<1x64x64xf32> to vector<64x64xf32>
    %c0_3 = arith.constant 0 : index
    %c0_4 = arith.constant 0 : index
    %c0_5 = arith.constant 0 : index
    %5 = vector.load %arg3[%c0_3, %c0_4, %c0_5] : memref<1x1x64xf32, #tpu.memory_space<vmem>>, vector<1x1x64xf32>
    %6 = vector.shape_cast %5 : vector<1x1x64xf32> to vector<1x64xf32>
    %cst = arith.constant dense<0.000000e+00> : vector<64xf32>
    %7 = vector.multi_reduction <add>, %4, %cst [0] : vector<64x64xf32> to vector<64xf32>
    %8 = vector.shape_cast %7 : vector<64xf32> to vector<1x64xf32>
    %9 = arith.addf %6, %8 : vector<1x64xf32>
    %c0_6 = arith.constant 0 : index
    %c0_7 = arith.constant 0 : index
    %c0_8 = arith.constant 0 : index
    %10 = vector.load %arg3[%c0_6, %c0_7, %c0_8] : memref<1x1x64xf32, #tpu.memory_space<vmem>>, vector<1x1x64xf32>
    %11 = vector.shape_cast %10 : vector<1x1x64xf32> to vector<1x64xf32>
    %12 = vector.shape_cast %9 : vector<1x64xf32> to vector<1x1x64xf32>
    tpu.vector_store %arg3[%c0_6, %c0_7, %c0_8], %12 {strides = array<i32>} : memref<1x1x64xf32, #tpu.memory_space<vmem>>, vector<1x1x64xf32>,
    %c0_9 = arith.constant 0 : index
    %c0_10 = arith.constant 0 : index
    %c0_11 = arith.constant 0 : index
    %13 = vector.load %arg4[%c0_9, %c0_10, %c0_11] : memref<1x1x64xf32, #tpu.memory_space<vmem>>, vector<1x1x64xf32>
    %14 = vector.shape_cast %13 : vector<1x1x64xf32> to vector<1x64xf32>
    %15 = arith.mulf %4, %4 : vector<64x64xf32>
    %cst_12 = arith.constant dense<0.000000e+00> : vector<64xf32>
    %16 = vector.multi_reduction <add>, %15, %cst_12 [0] : vector<64x64xf32> to vector<64xf32>
    %17 = vector.shape_cast %16 : vector<64xf32> to vector<1x64xf32>
    %18 = arith.addf %14, %17 : vector<1x64xf32>
    %c0_13 = arith.constant 0 : index
    %c0_14 = arith.constant 0 : index
    %c0_15 = arith.constant 0 : index
    %19 = vector.load %arg4[%c0_13, %c0_14, %c0_15] : memref<1x1x64xf32, #tpu.memory_space<vmem>>, vector<1x1x64xf32>
    %20 = vector.shape_cast %19 : vector<1x1x64xf32> to vector<1x64xf32>
    %21 = vector.shape_cast %18 : vector<1x64xf32> to vector<1x1x64xf32>
    tpu.vector_store %arg4[%c0_13, %c0_14, %c0_15], %21 {strides = array<i32>} : memref<1x1x64xf32, #tpu.memory_space<vmem>>, vector<1x1x64xf32>,
    return
  }
  func.func @transform_0(%arg0: i32, %arg1: i32) -> (i32, i32, i32) {
    %c0_i32 = arith.constant 0 : i32
    %c0_i32_0 = arith.constant 0 : i32
    return %arg0, %arg1, %c0_i32 : i32, i32, i32
  }
  func.func @transform_1(%arg0: i32, %arg1: i32) -> (i32, i32, i32) {
    %c0_i32 = arith.constant 0 : i32
    %c0_i32_0 = arith.constant 0 : i32
    %c0_i32_1 = arith.constant 0 : i32
    return %arg0, %c0_i32, %c0_i32_0 : i32, i32, i32
  }
  func.func @transform_2(%arg0: i32, %arg1: i32) -> (i32, i32, i32) {
    %c0_i32 = arith.constant 0 : i32
    %c0_i32_0 = arith.constant 0 : i32
    %c0_i32_1 = arith.constant 0 : i32
    return %arg0, %c0_i32, %c0_i32_0 : i32, i32, i32
  }
}

</mosaic_0001>

<llo_original>
// kernel: tpu_custom_call.1
$region0: #{tpu_custom_call.1}
  #allocation0 [shape = 'u32[]', space=smem, size = 0x4, offset = 0x4, fixed_abs, tag = 'smem constant byte address 0x4 - core index']
  #allocation1 [shape = 'u32[72,128]{1,0:T(1,128)}', space=vmem, size = 0x9000, scoped, tag = 'internal scratch']
  %s0 = inlined_call_operand.hbm [shape: f32[2,64,64], index: 0, kind: input, shape index: {}]
  %s1 = inlined_call_operand.hbm [shape: f32[2,1,64], index: 1, kind: output, shape index: {0}]
  %s2 = inlined_call_operand.hbm [shape: f32[2,1,64], index: 2, kind: output, shape index: {1}]
  %3 = xla_tuple %s1, %s2
  %s4 = sld [smem:[#allocation0]]
  $region53: #{tpu_custom_call.1} parent=0
    _
  %s6 = ssub.s32 1, %s4
  %s7 = scalar_select 0, %s6, %s4
  $region1: #{tpu_custom_call.1} parent=0
    #allocation2 [shape = 'u8[65536]{0}', space=vmem, size = 0x10000, scoped, tag = 'input window, operand 0']
    #allocation3 [shape = 's32[2]{0}', space=sflag, size = 0x8, scoped, tag = 'scoped memory for tpu_custom_call.1']
    #allocation4 [shape = 's32[2]{0}', space=sflag, size = 0x8, scoped, tag = 'scoped memory for tpu_custom_call.1']
    #allocation5 [shape = 'u8[1024]{0}', space=vmem, size = 0x400, scoped, tag = 'output window, operand 0']
    #allocation6 [shape = 'u8[1024]{0}', space=vmem, size = 0x400, scoped, tag = 'output window, operand 1']
    #allocation7 [shape = 's32[2]{0}', space=sflag, size = 0x8, scoped, tag = 'scoped memory for tpu_custom_call.1']
    %8 = vsyncpa [#allocation3], 0
    %s9 = scalar_lea.sflag [#allocation3], 1
    %10 = vsyncpa %s9, 0
    %11 = vsyncpa [#allocation4], 0
    %s12 = scalar_lea.sflag [#allocation4], 1
    %13 = vsyncpa %s12, 0
    %14 = vsyncpa [#allocation7], 0
    %s15 = scalar_lea.sflag [#allocation7], 1
    %16 = vsyncpa %s15, 0
    loop: start=0, step=1, limit=4
    $region2: #{tpu_custom_call.1} parent=1 // loop_pre_header
      _
    $region3: #{tpu_custom_call.1} parent=1 // loop_header
      %s18 = sphi 0, %s22
      %p19 = scmp.ge.s32.totalorder %s18, 4
      %s25 = sphi 0, %s37
      %s26 = sphi 0, %s33
      %s27 = sphi 0, %s25
      %s28 = sphi 0, %s26
      %s29 = sphi 0, %s27
      %s30 = sphi 0, %s28
      %s42 = sphi 0, %s44
      %s45 = sphi 0, %s42
      %s46 = sphi 0, %s45
      %s62 = sphi 0, %s46
      %s68 = sphi 0, %s70
      %s71 = sphi 0, %s68
      %s72 = sphi 0, %s71
      %s88 = sphi 0, %s72
      %s94 = sphi 0, %s96
      %s97 = sphi 0, %s94
      %s98 = sphi 0, %s97
      %s114 = sphi 0, %s98
    $region4: #{tpu_custom_call.1} parent=1 // loop_header_branch
      %21 = sbr.rel (%p19) target = $region8
    $region5: #{tpu_custom_call.1} parent=1 // loop_body
      %s23 = ssub.s32 %s18, 1
      %s24 = ssub.s32 %s18, 2
      %s31 = sadd.s32 1, %s26
      %p32 = scmp.ge.s32.totalorder %s31, 1
      %s33 = scalar_select %p32, 0, %s31
      %s34 = sadd.s32 1, %s25
      %s35 = scalar_select %p32, %s34, %s25
      %p36 = scmp.ge.s32.totalorder %s35, 2
      %s37 = scalar_select %p36, 0, %s35
      %s38 = ssub.s32 %s25, %s37
      %s39 = ssub.s32 %s26, %s33
      %s40 = sor.u32 %s38, %s39
      %p41 = scmp.eq.s32.totalorder %s40, 0
      %s43 = sadd.s32 %s42, 1
      %s44 = scalar_select %p41, %s42, %s43
      %p47 = pneg %p41
      %p48 = scmp.eq.s32.totalorder %s18, 1
      %p49 = por %p47, %p48
      %p50 = scmp.ne.s32.totalorder %s42, %s45
      %p51 = scmp.eq.s32.totalorder %s18, 0
      %p52 = por %p50, %p51
      %p53 = scmp.ne.s32.totalorder %s42, %s45
      %p54 = scmp.eq.s32.totalorder %s23, 1
      %p55 = por %p53, %p54
      %p56 = scmp.ne.s32.totalorder %s45, %s46
      %p57 = scmp.eq.s32.totalorder %s23, 0
      %p58 = por %p56, %p57
      %p59 = scmp.ne.s32.totalorder %s45, %s46
      %p60 = scmp.eq.s32.totalorder %s24, 1
      %p61 = por %p59, %p60
      %p63 = scmp.ne.s32.totalorder %s46, %s62
      %p64 = scmp.eq.s32.totalorder %s24, 0
      %p65 = por %p63, %p64
      %s66 = ssub.s32 %s25, %s37
      %p67 = scmp.eq.s32.totalorder %s66, 0
      %s69 = sadd.s32 %s68, 1
      %s70 = scalar_select %p67, %s68, %s69
      %p73 = pneg %p67
      %p74 = scmp.eq.s32.totalorder %s18, 1
      %p75 = por %p73, %p74
      %p76 = scmp.ne.s32.totalorder %s68, %s71
      %p77 = scmp.eq.s32.totalorder %s18, 0
      %p78 = por %p76, %p77
      %p79 = scmp.ne.s32.totalorder %s68, %s71
      %p80 = scmp.eq.s32.totalorder %s23, 1
      %p81 = por %p79, %p80
      %p82 = scmp.ne.s32.totalorder %s71, %s72
      %p83 = scmp.eq.s32.totalorder %s23, 0
      %p84 = por %p82, %p83
      %p85 = scmp.ne.s32.totalorder %s71, %s72
      %p86 = scmp.eq.s32.totalorder %s24, 1
      %p87 = por %p85, %p86
      %p89 = scmp.ne.s32.totalorder %s72, %s88
      %p90 = scmp.eq.s32.totalorder %s24, 0
      %p91 = por %p89, %p90
      %s92 = ssub.s32 %s25, %s37
      %p93 = scmp.eq.s32.totalorder %s92, 0
      %s95 = sadd.s32 %s94, 1
      %s96 = scalar_select %p93, %s94, %s95
      %p99 = pneg %p93
      %p100 = scmp.eq.s32.totalorder %s18, 1
      %p101 = por %p99, %p100
      %p102 = scmp.ne.s32.totalorder %s94, %s97
      %p103 = scmp.eq.s32.totalorder %s18, 0
      %p104 = por %p102, %p103
      %p105 = scmp.ne.s32.totalorder %s94, %s97
      %p106 = scmp.eq.s32.totalorder %s23, 1
      %p107 = por %p105, %p106
      %p108 = scmp.ne.s32.totalorder %s97, %s98
      %p109 = scmp.eq.s32.totalorder %s23, 0
      %p110 = por %p108, %p109
      %p111 = scmp.ne.s32.totalorder %s97, %s98
      %p112 = scmp.eq.s32.totalorder %s24, 1
      %p113 = por %p111, %p112
      %p115 = scmp.ne.s32.totalorder %s98, %s114
      %p116 = scmp.eq.s32.totalorder %s24, 0
      %p117 = por %p115, %p116
      %p118 = scmp.le.s32.totalorder 1, %s18
      %p119 = scmp.lt.s32.totalorder %s18, 3
      %p120 = pnand %p118, %p119
      %p121 = pneg %p120
      // Predicated region
      $region9: #{tpu_custom_call.1} parent=5 // pred_check
        _
      $region10: #{tpu_custom_call.1} parent=5 // pred_check_branch
        %123 = sbr.rel (%p120) target = $region12
      $region11: #{tpu_custom_call.1} parent=5 // pred_region
        %s124 = ssub.s32 %s18, 1
      $region12: #{tpu_custom_call.1} parent=5 // pred_fallthru
        _
      %p125 = scmp.lt.s32.totalorder %s18, 2
      // Predicated region
      $region13: #{tpu_custom_call.1} parent=5 // pred_check
        %p126 = pneg %p125
      $region14: #{tpu_custom_call.1} parent=5 // pred_check_branch
        %128 = sbr.rel (%p126) target = $region16
      $region15: #{tpu_custom_call.1} parent=5 // pred_region
        // Predicated region
        $region17: #{tpu_custom_call.1} parent=15 // pred_check
          %p129 = pneg %p52
        $region18: #{tpu_custom_call.1} parent=15 // pred_check_branch
          %131 = sbr.rel (%p129) target = $region20
        $region19: #{tpu_custom_call.1} parent=15 // pred_region
          %s132 = sand.u32 %s42, 1
          %s133 = scalar_lea.sflag [#allocation3], %s132
          %s134 = sand.u32 %s42, 1
          %s135 = smul.addr %s134, 64
          %s136 = scalar_lea.vmem [#allocation2], %s135
          %s137 = smul.u32 8, %s26
          %139 = vsyncadd %s133, 0
          %s140 = smul.addr %s25, 8
          %s141 = sadd.s32 %s137, %s140
          %s142 = smul.addr %s141, 8
          %s143 = scalar_lea.hbm %s0, %s142
          %s144 = sshll.u32 %s143, 4
          %s145 = int_to_ptr.hbm [resolvable:$true] %s144
          %s146 = sshll.u32 %s136, 4
          %s147 = int_to_ptr.vmem [resolvable:$true] %s146
          %152 = dma.hbm_to_vmem [thread:$0]  %s145, 1024, %s147, %s133, 128, 128, 8
        $region20: #{tpu_custom_call.1} parent=15 // pred_fallthru
          _
      $region16: #{tpu_custom_call.1} parent=5 // pred_fallthru
        _
      %p153 = scmp.le.s32.totalorder 1, %s18
      %p154 = scmp.lt.s32.totalorder %s18, 3
      %p155 = pnand %p153, %p154
      %p156 = pneg %p155
      // Predicated region
      $region21: #{tpu_custom_call.1} parent=5 // pred_check
        _
      $region22: #{tpu_custom_call.1} parent=5 // pred_check_branch
        %158 = sbr.rel (%p155) target = $region24
      $region23: #{tpu_custom_call.1} parent=5 // pred_region
        %s159 = ssub.s32 %s18, 1
        %s160 = sand.u32 %s45, 1
        %s161 = scalar_lea.sflag [#allocation3], %s160
        %s162 = sand.u32 %s45, 1
        %s163 = smul.addr %s162, 64
        %s164 = scalar_lea.vmem [#allocation2], %s163
        // Predicated region
        $region25: #{tpu_custom_call.1} parent=23 // pred_check
          %p165 = pneg %p58
        $region26: #{tpu_custom_call.1} parent=23 // pred_check_branch
          %167 = sbr.rel (%p165) target = $region28
        $region27: #{tpu_custom_call.1} parent=23 // pred_region
          %169 = dma.done %s161, 1024
        $region28: #{tpu_custom_call.1} parent=23 // pred_fallthru
          _
        %s170 = sand.u32 %s45, 1
        %s171 = scalar_lea.sflag [#allocation3], %s170
        %s172 = sand.u32 %s45, 1
        %s173 = smul.addr %s172, 64
        %s174 = scalar_lea.vmem [#allocation2], %s173
        %p175 = pneg %p58
        %p176 = pneg %p55
        %p177 = pneg %p84
        %p178 = pneg %p81
        %s179 = sand.u32 %s71, 1
        %s180 = scalar_lea.sflag [#allocation4], %s179
        %s181 = sand.u32 %s71, 1
        %s182 = scalar_lea.vmem [#allocation5], %s181
        %p183 = pneg %p110
        %p184 = pneg %p107
        %s185 = sand.u32 %s97, 1
        %s186 = scalar_lea.sflag [#allocation7], %s185
        %s187 = sand.u32 %s97, 1
        %s188 = scalar_lea.vmem [#allocation6], %s187
        %s189 = smul.u32 8, %s28
        %p190 = scmp.eq.s32.totalorder %s28, 0
        // Predicated region
        $region29: #{tpu_custom_call.1} parent=23 // pred_check
          %p191 = pneg %p190
        $region30: #{tpu_custom_call.1} parent=23 // pred_check_branch
          %193 = sbr.rel (%p191) target = $region32
        $region31: #{tpu_custom_call.1} parent=23 // pred_region
          %vm194 = vcmask 516096
          %195 = vst.msk [vmem:[%s182] sm:$0x1] %vm194, 0.0
          %196 = vst.msk [vmem:[%s188] sm:$0x1] %vm194, 0.0
        $region32: #{tpu_custom_call.1} parent=23 // pred_fallthru
          _
        %v197 = vld [vmem:[%s164] sm:$0xff]
        %v198 = vld [vmem:[%s164 + $0x8] sm:$0xff]
        %v199 = vld [vmem:[%s164 + $0x10] sm:$0xff]
        %v200 = vld [vmem:[%s164 + $0x18] sm:$0xff]
        %v201 = vld [vmem:[%s164 + $0x20] sm:$0xff]
        %v202 = vld [vmem:[%s164 + $0x28] sm:$0xff]
        %v203 = vld [vmem:[%s164 + $0x30] sm:$0xff]
        %v204 = vld [vmem:[%s164 + $0x38] sm:$0xff]
        %v205 = vld [vmem:[%s182] sm:$0x1]
        %vm206 = vcmask 523264
        %v207 = vsel %vm206, %v197, 0.0
        %v208 = vsel %vm206, %v198, 0.0
        %v209 = vadd.f32 %v207, %v208
        %v210 = vsel %vm206, %v199, 0.0
        %v211 = vadd.f32 %v209, %v210
        %v212 = vsel %vm206, %v200, 0.0
        %v213 = vadd.f32 %v211, %v212
        %v214 = vsel %vm206, %v201, 0.0
        %v215 = vadd.f32 %v213, %v214
        %v216 = vsel %vm206, %v202, 0.0
        %v217 = vadd.f32 %v215, %v216
        %v218 = vsel %vm206, %v203, 0.0
        %v219 = vadd.f32 %v217, %v218
        %v220 = vsel %vm206, %v204, 0.0
        %v221 = vadd.f32 %v219, %v220
        %v222 = vrot.slane %v221, 4
        %v223 = vadd.f32 %v221, %v222
        %v224 = vrot.slane %v223, 2
        %v225 = vadd.f32 %v223, %v224
        %v226 = vrot.slane %v225, 1
        %v227 = vadd.f32 %v225, %v226
        %v228 = vadd.f32 %v205, %v227
        %vm229 = vcmask 516096
        %230 = vst.msk [vmem:[%s182] sm:$0x1] %vm229, %v228
        %v231 = vld [vmem:[%s188] sm:$0x1]
        %v232 = vmul.f32 %v197, %v197
        %v233 = vmul.f32 %v198, %v198
        %v234 = vmul.f32 %v199, %v199
        %v235 = vmul.f32 %v200, %v200
        %v236 = vmul.f32 %v201, %v201
        %v237 = vmul.f32 %v202, %v202
        %v238 = vmul.f32 %v203, %v203
        %v239 = vmul.f32 %v204, %v204
        %v240 = vsel %vm206, %v232, 0.0
        %v241 = vsel %vm206, %v233, 0.0
        %v242 = vadd.f32 %v240, %v241
        %v243 = vsel %vm206, %v234, 0.0
        %v244 = vadd.f32 %v242, %v243
        %v245 = vsel %vm206, %v235, 0.0
        %v246 = vadd.f32 %v244, %v245
        %v247 = vsel %vm206, %v236, 0.0
        %v248 = vadd.f32 %v246, %v247
        %v249 = vsel %vm206, %v237, 0.0
        %v250 = vadd.f32 %v248, %v249
        %v251 = vsel %vm206, %v238, 0.0
        %v252 = vadd.f32 %v250, %v251
        %v253 = vsel %vm206, %v239, 0.0
        %v254 = vadd.f32 %v252, %v253
        %v255 = vrot.slane %v254, 4
        %v256 = vadd.f32 %v254, %v255
        %v257 = vrot.slane %v256, 2
        %v258 = vadd.f32 %v256, %v257
        %v259 = vrot.slane %v258, 1
        %v260 = vadd.f32 %v258, %v259
        %v261 = vadd.f32 %v231, %v260
        %262 = vst.msk [vmem:[%s188] sm:$0x1] %vm229, %v261
        %s263 = sand.u32 %s71, 1
        %s264 = scalar_lea.sflag [#allocation4], %s263
        %s265 = sand.u32 %s71, 1
        %s266 = scalar_lea.vmem [#allocation5], %s265
        %s267 = sand.u32 %s97, 1
        %s268 = scalar_lea.sflag [#allocation7], %s267
        %s269 = sand.u32 %s97, 1
        %s270 = scalar_lea.vmem [#allocation6], %s269
        // Predicated region
        $region33: #{tpu_custom_call.1} parent=23 // pred_check
          %p271 = pneg %p81
        $region34: #{tpu_custom_call.1} parent=23 // pred_check_branch
          %273 = sbr.rel (%p271) target = $region36
        $region35: #{tpu_custom_call.1} parent=23 // pred_region
          %275 = vsyncadd %s264, 0
          %s276 = scalar_lea.hbm %s1, %s27
          %s278 = sshll.u32 %s266, 4
          %s279 = int_to_ptr.vmem [resolvable:$true] %s278
          %s280 = sshll.u32 %s276, 4
          %s281 = int_to_ptr.hbm [resolvable:$true] %s280
          %283 = dma.vmem_to_hbm [thread:$0]  %s279, 16, %s281, %s264
        $region36: #{tpu_custom_call.1} parent=23 // pred_fallthru
          _
        // Predicated region
        $region37: #{tpu_custom_call.1} parent=23 // pred_check
          %p284 = pneg %p107
        $region38: #{tpu_custom_call.1} parent=23 // pred_check_branch
          %286 = sbr.rel (%p284) target = $region40
        $region39: #{tpu_custom_call.1} parent=23 // pred_region
          %288 = vsyncadd %s268, 0
          %s289 = scalar_lea.hbm %s2, %s27
          %s291 = sshll.u32 %s270, 4
          %s292 = int_to_ptr.vmem [resolvable:$true] %s291
          %s293 = sshll.u32 %s289, 4
          %s294 = int_to_ptr.hbm [resolvable:$true] %s293
          %296 = dma.vmem_to_hbm [thread:$0]  %s292, 16, %s294, %s268
        $region40: #{tpu_custom_call.1} parent=23 // pred_fallthru
          _
      $region24: #{tpu_custom_call.1} parent=5 // pred_fallthru
        _
      %p297 = scmp.le.s32.totalorder 2, %s18
      // Predicated region
      $region41: #{tpu_custom_call.1} parent=5 // pred_check
        %p298 = pneg %p297
      $region42: #{tpu_custom_call.1} parent=5 // pred_check_branch
        %300 = sbr.rel (%p298) target = $region44
      $region43: #{tpu_custom_call.1} parent=5 // pred_region
        %s301 = ssub.s32 %s18, 2
        // Predicated region
        $region45: #{tpu_custom_call.1} parent=43 // pred_check
          %p302 = pneg %p87
        $region46: #{tpu_custom_call.1} parent=43 // pred_check_branch
          %304 = sbr.rel (%p302) target = $region48
        $region47: #{tpu_custom_call.1} parent=43 // pred_region
          %s305 = sand.u32 %s72, 1
          %s306 = scalar_lea.sflag [#allocation4], %s305
          %s307 = sand.u32 %s72, 1
          %s308 = scalar_lea.vmem [#allocation5], %s307
          %310 = dma.done %s306, 16
        $region48: #{tpu_custom_call.1} parent=43 // pred_fallthru
          _
        // Predicated region
        $region49: #{tpu_custom_call.1} parent=43 // pred_check
          %p311 = pneg %p113
        $region50: #{tpu_custom_call.1} parent=43 // pred_check_branch
          %313 = sbr.rel (%p311) target = $region52
        $region51: #{tpu_custom_call.1} parent=43 // pred_region
          %s314 = sand.u32 %s98, 1
          %s315 = scalar_lea.sflag [#allocation7], %s314
          %s316 = sand.u32 %s98, 1
          %s317 = scalar_lea.vmem [#allocation6], %s316
          %319 = dma.done %s315, 16
        $region52: #{tpu_custom_call.1} parent=43 // pred_fallthru
          _
      $region44: #{tpu_custom_call.1} parent=5 // pred_fallthru
        _
    $region6: #{tpu_custom_call.1} parent=1 // loop_footer
      %s22 = sadd.s32 1, %s18
    $region7: #{tpu_custom_call.1} parent=1 // loop_footer_branch
      %17 = sbr.rel target = $region3
    $region8: #{tpu_custom_call.1} parent=1 // loop_exit
      _
    %320 = vsyncpa [#allocation3], 1
    %s321 = scalar_lea.sflag [#allocation3], 1
    %322 = vsyncpa %s321, 1
    %323 = vsyncpa [#allocation4], 1
    %s324 = scalar_lea.sflag [#allocation4], 1
    %325 = vsyncpa %s324, 1
    %326 = vsyncpa [#allocation7], 1
    %s327 = scalar_lea.sflag [#allocation7], 1
    %328 = vsyncpa %s327, 1

</llo_original>
